<compile_context>
chip_gen: v7x
topology: tpu7x:2x2x1
jax: 0.10.0
libtpu: 0.0.40
codegen_flags: <defaults>
</compile_context>

<pallas_src>
import jax
import jax.numpy as jnp
from jax.experimental import pallas as pl
from jax.experimental.pallas import tpu as pltpu


def _silu_kernel(x_ref, o_ref):
    x = x_ref[...]
    xf = x.astype(jnp.float32)
    # sigmoid(x) = 0.5 * (tanh(x/2) + 1): single EUP transcendental.
    sig = 0.5 * (jnp.tanh(0.5 * xf) + 1.0)
    o_ref[...] = (xf * sig).astype(o_ref.dtype)


def silu_pallas(x: jax.Array, *, target_block_bytes: int = 2 * 1024 * 1024) -> jax.Array:
    """Elementwise SiLU on any shape/dtype via a lane-dense 2D slab."""
    orig_shape = x.shape
    dtype = x.dtype
    n = x.size
    if n == 0:
        return x

    # Widest lane count that divides n exactly -> zero-copy fast path.
    lane = 128
    for cand in (1024, 512, 256, 128):
        if n % cand == 0:
            lane = cand
            break

    pad = (-n) % lane
    flat = jnp.reshape(x, (-1,))
    if pad:
        # Only for ragged sizes (not a 128-multiple).  SiLU(0) == 0, safe.
        flat = jnp.pad(flat, (0, pad))
    rows = flat.size // lane
    slab = jnp.reshape(flat, (rows, lane))

    # Row tile sized for ~target_block_bytes per block, multiple of 8 sublanes,
    # never (much) larger than the data itself.
    itemsize = jnp.dtype(dtype).itemsize
    row_bytes = lane * itemsize
    tile_rows = max(8, (target_block_bytes // row_bytes) // 8 * 8)
    rows_padded_to_sublane = max(8, ((rows + 7) // 8) * 8)
    tile_rows = min(tile_rows, rows_padded_to_sublane)

    grid = (pl.cdiv(rows, tile_rows),)

    out = pl.pallas_call(
        _silu_kernel,
        out_shape=jax.ShapeDtypeStruct((rows, lane), dtype),
        grid_spec=pl.GridSpec(
            grid=grid,
            in_specs=[pl.BlockSpec((tile_rows, lane), lambda i: (i, 0))],
            out_specs=pl.BlockSpec((tile_rows, lane), lambda i: (i, 0)),
        ),
        compiler_params=pltpu.CompilerParams(
            dimension_semantics=("parallel",),
        ),
    )(slab)

    if pad:
        out = jnp.reshape(out, (-1,))[:n]
    return jnp.reshape(out, orig_shape)


if __name__ == "__main__":
    key = jax.random.PRNGKey(0)
    # NCHW like the PyTorch module: batch=2, channels=4, spatial=16x16.
    x = jax.random.normal(key, (2, 4, 16, 16), dtype=jnp.float32)

    y = silu_pallas(x)
    y = jax.block_until_ready(y)

    # Reference check against plain JAX (tanh-form sigmoid -> slightly looser tol).
    y_ref = x * jax.nn.sigmoid(x)
    assert y.shape == x.shape and y.dtype == x.dtype
    assert jnp.allclose(y, y_ref, atol=1e-5, rtol=1e-5)

    print("KERNEL_OK")
</pallas_src>

<mosaic_0001>
module attributes {stable_mosaic.version = 11 : i64} {
  func.func @_silu_kernel(%arg0: i32, %arg1: memref<8x1024xf32, #tpu.memory_space<vmem>>, %arg2: memref<8x1024xf32, #tpu.memory_space<vmem>>) attributes {dimension_semantics = [#tpu.dimension_semantics<parallel>], iteration_bounds = array<i64: 1>, scalar_prefetch = 0 : i64, scratch_operands = 0 : i64, tpu.core_type = #tpu.core_type<tc>, window_params = [{transform_indices = @transform_0, window_bounds = array<i64: 8, 1024>}, {transform_indices = @transform_1, window_bounds = array<i64: 8, 1024>}]} {
    %c0 = arith.constant 0 : index
    %c0_0 = arith.constant 0 : index
    %0 = vector.load %arg1[%c0, %c0_0] : memref<8x1024xf32, #tpu.memory_space<vmem>>, vector<8x1024xf32>
    %cst = arith.constant 5.000000e-01 : f32
    %1 = vector.broadcast %cst : f32 to vector<8x1024xf32>
    %2 = arith.mulf %1, %0 : vector<8x1024xf32>
    %3 = math.tanh %2 : vector<8x1024xf32>
    %cst_1 = arith.constant 1.000000e+00 : f32
    %4 = vector.broadcast %cst_1 : f32 to vector<8x1024xf32>
    %5 = arith.addf %3, %4 : vector<8x1024xf32>
    %cst_2 = arith.constant 5.000000e-01 : f32
    %6 = vector.broadcast %cst_2 : f32 to vector<8x1024xf32>
    %7 = arith.mulf %6, %5 : vector<8x1024xf32>
    %8 = arith.mulf %0, %7 : vector<8x1024xf32>
    %c0_3 = arith.constant 0 : index
    %c0_4 = arith.constant 0 : index
    %9 = vector.load %arg2[%c0_3, %c0_4] : memref<8x1024xf32, #tpu.memory_space<vmem>>, vector<8x1024xf32>
    tpu.vector_store %arg2[%c0_3, %c0_4], %8 {strides = array<i32>} : memref<8x1024xf32, #tpu.memory_space<vmem>>, vector<8x1024xf32>,
    return
  }
  func.func @transform_0(%arg0: i32) -> (i32, i32) {
    %c0_i32 = arith.constant 0 : i32
    %c0_i32_0 = arith.constant 0 : i32
    return %arg0, %c0_i32 : i32, i32
  }
  func.func @transform_1(%arg0: i32) -> (i32, i32) {
    %c0_i32 = arith.constant 0 : i32
    %c0_i32_0 = arith.constant 0 : i32
    return %arg0, %c0_i32 : i32, i32
  }
}

</mosaic_0001>

<llo_original>
// kernel: tpu_custom_call.1
$region0: #{tpu_custom_call.1}
  #allocation0 [shape = 'u32[]', space=smem, size = 0x4, offset = 0x4, fixed_abs, tag = 'smem constant byte address 0x4 - core index']
  #allocation1 [shape = 'u32[144,128]{1,0:T(1,128)}', space=vmem, size = 0x12000, scoped, tag = 'internal scratch']
  %s0 = inlined_call_operand.hbm [shape: f32[2,1024], index: 0, kind: input, shape index: {}]
  %s1 = inlined_call_operand.hbm [shape: f32[2,1024], index: 1, kind: output, shape index: {}]
  %s2 = sld [smem:[#allocation0]]
  $region18: #{tpu_custom_call.1} parent=0
    _
  %s4 = ssub.s32 1, %s2
  %s5 = scalar_select 0, %s4, %s2
  $region1: #{tpu_custom_call.1} parent=0
    #allocation2 [shape = 'u8[32768]{0}', space=vmem, size = 0x8000, scoped, tag = 'input window, operand 0, single buffered']
    #allocation3 [shape = 's32[1]{0}', space=sflag, size = 0x4, scoped, tag = 'scoped memory for tpu_custom_call.1']
    #allocation4 [shape = 's32[1]{0}', space=sflag, size = 0x4, scoped, tag = 'scoped memory for tpu_custom_call.1']
    #allocation5 [shape = 'u8[32768]{0}', space=vmem, size = 0x8000, scoped, tag = 'output window, operand 0, single buffered']
    %6 = vsyncpa [#allocation3], 0
    %7 = vsyncpa [#allocation4], 0
    // Predicated region
    $region2: #{tpu_custom_call.1} parent=1 // pred_check
      _
    $region3: #{tpu_custom_call.1} parent=1 // pred_check_branch
      %9 = sbr.rel (0) target = $region5
    $region4: #{tpu_custom_call.1} parent=1 // pred_region
      %s11 = ssub.s32 1024, 256
      %12 = vsyncadd [#allocation3], %s11
      %s13 = sshll.u32 [#allocation2], 4
      %s14 = int_to_ptr.vmem [resolvable:$true] %s13
      %19 = dma.hbm_to_vmem [thread:$0]  %s0, 256, %s14, [#allocation3], 256, 256, 16
    $region5: #{tpu_custom_call.1} parent=1 // pred_fallthru
      _
    // Predicated region
    $region6: #{tpu_custom_call.1} parent=1 // pred_check
      _
    $region7: #{tpu_custom_call.1} parent=1 // pred_check_branch
      %21 = sbr.rel (0) target = $region9
    $region8: #{tpu_custom_call.1} parent=1 // pred_region
      %22 = dma.done [#allocation3], 1024
    $region9: #{tpu_custom_call.1} parent=1 // pred_fallthru
      _
    %v23 = vld [vmem:[#allocation2] sm:$0xff]
    %v24 = vld [vmem:[#allocation2 + $0x8] sm:$0xff]
    %v25 = vld [vmem:[#allocation2 + $0x10] sm:$0xff]
    %v26 = vld [vmem:[#allocation2 + $0x18] sm:$0xff]
    %v27 = vld [vmem:[#allocation2 + $0x20] sm:$0xff]
    %v28 = vld [vmem:[#allocation2 + $0x28] sm:$0xff]
    %v29 = vld [vmem:[#allocation2 + $0x30] sm:$0xff]
    %v30 = vld [vmem:[#allocation2 + $0x38] sm:$0xff]
    %v31 = vmul.f32 %v23, 0.5
    %v32 = vmul.f32 %v24, 0.5
    %v33 = vmul.f32 %v25, 0.5
    %v34 = vmul.f32 %v26, 0.5
    %v35 = vmul.f32 %v27, 0.5
    %v36 = vmul.f32 %v28, 0.5
    %v37 = vmul.f32 %v29, 0.5
    %v38 = vmul.f32 %v30, 0.5
    %v39 = vtanh.pop %v31
    %v40 = vtanh.pop %v32
    %v41 = vtanh.pop %v33
    %v42 = vtanh.pop %v34
    %v43 = vtanh.pop %v35
    %v44 = vtanh.pop %v36
    %v45 = vtanh.pop %v37
    %v46 = vtanh.pop %v38
    %v47 = vadd.f32 %v39, 1.0
    %v48 = vadd.f32 %v40, 1.0
    %v49 = vadd.f32 %v41, 1.0
    %v50 = vadd.f32 %v42, 1.0
    %v51 = vadd.f32 %v43, 1.0
    %v52 = vadd.f32 %v44, 1.0
    %v53 = vadd.f32 %v45, 1.0
    %v54 = vadd.f32 %v46, 1.0
    %v55 = vmul.f32 %v47, 0.5
    %v56 = vmul.f32 %v48, 0.5
    %v57 = vmul.f32 %v49, 0.5
    %v58 = vmul.f32 %v50, 0.5
    %v59 = vmul.f32 %v51, 0.5
    %v60 = vmul.f32 %v52, 0.5
    %v61 = vmul.f32 %v53, 0.5
    %v62 = vmul.f32 %v54, 0.5
    %v63 = vmul.f32 %v23, %v55
    %v64 = vmul.f32 %v24, %v56
    %v65 = vmul.f32 %v25, %v57
    %v66 = vmul.f32 %v26, %v58
    %v67 = vmul.f32 %v27, %v59
    %v68 = vmul.f32 %v28, %v60
    %v69 = vmul.f32 %v29, %v61
    %v70 = vmul.f32 %v30, %v62
    %71 = vst [vmem:[#allocation5] sm:$0xff] %v63
    %72 = vst [vmem:[#allocation5 + $0x8] sm:$0xff] %v64
    %73 = vst [vmem:[#allocation5 + $0x10] sm:$0xff] %v65
    %74 = vst [vmem:[#allocation5 + $0x18] sm:$0xff] %v66
    %75 = vst [vmem:[#allocation5 + $0x20] sm:$0xff] %v67
    %76 = vst [vmem:[#allocation5 + $0x28] sm:$0xff] %v68
    %77 = vst [vmem:[#allocation5 + $0x30] sm:$0xff] %v69
    %78 = vst [vmem:[#allocation5 + $0x38] sm:$0xff] %v70
    // Predicated region
    $region10: #{tpu_custom_call.1} parent=1 // pred_check
      _
    $region11: #{tpu_custom_call.1} parent=1 // pred_check_branch
      %80 = sbr.rel (0) target = $region13
    $region12: #{tpu_custom_call.1} parent=1 // pred_region
      %s82 = ssub.s32 1024, 256
      %83 = vsyncadd [#allocation4], %s82
      %s84 = sshll.u32 [#allocation5], 4
      %s85 = int_to_ptr.vmem [resolvable:$true] %s84
      %90 = dma.vmem_to_hbm [thread:$0]  %s85, 256, %s1, [#allocation4], 256, 256, 16
    $region13: #{tpu_custom_call.1} parent=1 // pred_fallthru
      _
    // Predicated region
    $region14: #{tpu_custom_call.1} parent=1 // pred_check
      _
    $region15: #{tpu_custom_call.1} parent=1 // pred_check_branch
      %92 = sbr.rel (0) target = $region17
    $region16: #{tpu_custom_call.1} parent=1 // pred_region
      %93 = dma.done [#allocation4], 1024
    $region17: #{tpu_custom_call.1} parent=1 // pred_fallthru
      _
    %94 = vsyncpa [#allocation3], 1
    %95 = vsyncpa [#allocation4], 1

</llo_original>
